<compile_context>
chip_gen: v7x
topology: tpu7x:2x2x1
jax: 0.10.0
libtpu: 0.0.40
codegen_flags: <defaults>
</compile_context>

<pallas_src>
import functools

import jax
import jax.numpy as jnp
from jax.experimental import pallas as pl
from jax.experimental.pallas import tpu as pltpu

EPS = 1e-10
LANE = 128              # lane width: last dim of every block
MAX_ROW_TILE = 2048     # (2048, 128) f32 block = 1 MiB per pipeline buffer
MIN_ROW_TILE = 8        # sublane alignment
VMEM_LIMIT = 32 * 1024 * 1024


def _row_tiling(n):
    """n elements -> (n_pad, rows, row_tile, grid_steps) for a (rows,128) layout.

    rows / row_tile are multiples of 8 so blocks satisfy the (8,128) rule.
    Medium/large problems get >= 2 grid steps so dimension_semantics='parallel'
    can shard over both v7x TensorCores; huge problems use 1 MiB blocks.
    """
    rows = pl.cdiv(max(n, 1), LANE)
    rows = pl.cdiv(rows, MIN_ROW_TILE) * MIN_ROW_TILE
    if rows <= MAX_ROW_TILE:
        if rows >= 2 * MIN_ROW_TILE:
            row_tile = pl.cdiv(pl.cdiv(rows, 2), MIN_ROW_TILE) * MIN_ROW_TILE
            rows = 2 * row_tile
        else:
            row_tile = rows
    else:
        row_tile = MAX_ROW_TILE
        rows = pl.cdiv(rows, row_tile) * row_tile
    return rows * LANE, rows, row_tile, rows // row_tile


def _pad_rows(x, n_pad, rows):
    """1-D array -> zero-padded (rows, 128) f32 slab (lane+sublane dense)."""
    x = jnp.asarray(x, jnp.float32).reshape(-1)
    x = jnp.pad(x, (0, n_pad - x.shape[0]))
    return x.reshape(rows, LANE)


# ----------------------------- kernel helpers -----------------------------

def _entropy_from_z(z):
    """2-class softmax entropy from the logit difference z = x1 - x0.

    H = softplus(z) - z * sigmoid(z): one exp + one log + one divide per
    element (vs exp + div + 2x log).  Matches the PyTorch
    (p+1e-10)*log(1/(p+1e-10)+1e-10) form to O(1e-9).  Exact divide is used
    on purpose: approx reciprocal could flip the floor() knife-edge terms.
    """
    e = jnp.exp(-jnp.abs(z))                              # EUP
    inv = 1.0 / (1.0 + e)                                 # EUP
    sig = jnp.where(z >= 0.0, inv, e * inv)               # sigmoid(z), no cancellation
    softplus = jnp.maximum(z, 0.0) + jnp.log(1.0 + e)     # EUP
    return softplus - z * sig


# ------------------------------ Pallas kernels ------------------------------

def node_entropy_kernel(z_ref, ent_ref):
    """(rt,128) node logit-differences -> (rt,128) unscaled 2-class entropies."""
    ent_ref[...] = _entropy_from_z(z_ref[...])


def edge_score_kernel(scales_ref, zc_ref, hs_ref, hd_ref, score_ref, *,
                      allow_disag):
    """scales: SMEM f32[2] = [split_scale, merge_scale]
       zc:     (rt,128) combined-pair logit differences
       hs/hd:  (rt,128) unscaled endpoint (src/dst node) entropies
       ->      (rt,128) contraction scores."""
    split = scales_ref[0]
    merge = scales_ref[1]
    hcomb = _entropy_from_z(zc_ref[...]) * merge
    ds = hs_ref[...] * split - hcomb
    dd = hd_ref[...] * split - hcomb
    score = (2.0 + ds) * (2.0 + dd)
    if not allow_disag:   # self.dont_allow_disag
        score = score * ((1.0 + jnp.floor(ds)) * (1.0 + jnp.floor(dd)))
    score_ref[...] = score


# ------------------------------ JAX wrappers ------------------------------

@jax.jit
def node_entropy(node_sig):
    """node_sig: (N, 2) class logits -> per-node entropy (N,) ('evotes')."""
    N = node_sig.shape[0]
    n_pad, rows, r_tile, grid = _row_tiling(N)
    sig = jnp.asarray(node_sig, jnp.float32)
    z = _pad_rows(sig[:, 1] - sig[:, 0], n_pad, rows)
    out = pl.pallas_call(
        node_entropy_kernel,
        out_shape=jax.ShapeDtypeStruct((rows, LANE), jnp.float32),
        grid=(grid,),
        in_specs=[pl.BlockSpec((r_tile, LANE), lambda i: (i, 0))],
        out_specs=pl.BlockSpec((r_tile, LANE), lambda i: (i, 0)),
        compiler_params=pltpu.CompilerParams(
            dimension_semantics=("parallel",),
            vmem_limit_bytes=VMEM_LIMIT),
    )(z)
    # NOTE: padded lanes (z = 0) hold garbage entropies (= log 2); they are
    # removed by the slice below and must stay masked for any future consumer.
    return out.reshape(n_pad)[:N]


@functools.partial(jax.jit, static_argnames=("allow_disag",))
def edge_scores(comb_sig, h_src, h_dst, pool_it, merge_p=0.01, split_q=0.01,
                mult_fac=1, allow_disag=False):
    """comb_sig: (E, 2) combined-pair logits; h_src/h_dst: (E,) unscaled
    endpoint entropies (per-node entropies gathered at the edge endpoints).

    pool_it / merge_p / split_q / mult_fac are *traced* scalars that land in
    SMEM, so one compiled kernel is reused across pooling iterations of the
    same edge count (no per-pool_it recompile).
    """
    E = comb_sig.shape[0]
    n_pad, rows, r_tile, grid = _row_tiling(E)

    denom = 1.0 + mult_fac * pool_it
    scales = jnp.array([1.0 + split_q / denom,     # split_scale
                        1.0 + merge_p / denom],    # merge_scale
                       dtype=jnp.float32)

    comb = jnp.asarray(comb_sig, jnp.float32)
    zc = _pad_rows(comb[:, 1] - comb[:, 0], n_pad, rows)   # fused XLA prep
    hs = _pad_rows(h_src, n_pad, rows)
    hd = _pad_rows(h_dst, n_pad, rows)

    kernel = functools.partial(edge_score_kernel, allow_disag=allow_disag)
    out = pl.pallas_call(
        kernel,
        out_shape=jax.ShapeDtypeStruct((rows, LANE), jnp.float32),
        grid=(grid,),
        in_specs=[
            pl.BlockSpec(memory_space=pltpu.MemorySpace.SMEM),     # scales
            pl.BlockSpec((r_tile, LANE), lambda i: (i, 0)),        # z_comb
            pl.BlockSpec((r_tile, LANE), lambda i: (i, 0)),        # h_src
            pl.BlockSpec((r_tile, LANE), lambda i: (i, 0)),        # h_dst
        ],
        out_specs=pl.BlockSpec((r_tile, LANE), lambda i: (i, 0)),
        compiler_params=pltpu.CompilerParams(
            dimension_semantics=("parallel",),
            vmem_limit_bytes=VMEM_LIMIT),
    )(scales, zc, hs, hd)
    return out.reshape(n_pad)[:E]


# ----------------------------- pure-JAX reference -----------------------------

def _ref_entropy(p):
    return (p[:, 0] + EPS) * jnp.log(1.0 / (p[:, 0] + EPS) + EPS) + \
           (p[:, 1] + EPS) * jnp.log(1.0 / (p[:, 1] + EPS) + EPS)


def reference_scores(src_sig, dst_sig, comb_sig, pool_it, merge_p, split_q,
                     mult_fac, allow_disag=False):
    split_scale = 1.0 + split_q / (1.0 + mult_fac * pool_it)
    merge_scale = 1.0 + merge_p / (1.0 + mult_fac * pool_it)
    hstc = _ref_entropy(jax.nn.softmax(src_sig, axis=-1)) * split_scale
    hdest = _ref_entropy(jax.nn.softmax(dst_sig, axis=-1)) * split_scale
    hcomb = _ref_entropy(jax.nn.softmax(comb_sig, axis=-1)) * merge_scale
    s = (2.0 + (hstc - hcomb)) * (2.0 + (hdest - hcomb))
    if not allow_disag:
        s = s * ((1.0 + jnp.floor(hstc - hcomb)) *
                 (1.0 + jnp.floor(hdest - hcomb)))
    return s


# ---------------------------------- driver ----------------------------------

if __name__ == "__main__":
    key = jax.random.PRNGKey(0)
    k1, k2 = jax.random.split(key)

    # Small synthetic graph: N nodes, ring + chord edges.
    N = 16
    src = jnp.array([i for i in range(N)] + [0, 2, 4, 6, 8, 10, 12, 14],
                    dtype=jnp.int32)
    dst = jnp.array([(i + 1) % N for i in range(N)] + [5, 7, 9, 11, 13, 15, 1, 3],
                    dtype=jnp.int32)
    E = src.shape[0]

    # TODO(synk): in the real module, node / pair class logits come from the
    # external GNN `self.model` evaluated on DGL node-subgraphs (get_score /
    # score_map caching); synthesize them deterministically here.
    node_sigmoids = jax.random.normal(k1, (N, 2), dtype=jnp.float32)
    comb_sigmoids = jax.random.normal(k2, (E, 2), dtype=jnp.float32)

    merge_p, split_q, mult_fac = 0.01, 0.01, 1

    # 1) Per-node entropy once (also provides new_g.ndata['evotes']).
    node_ent = node_entropy(node_sigmoids)                 # (N,)
    # 2) Gather endpoint entropies (softmax/entropy commute with the gather).
    h_src = node_ent[src]
    h_dst = node_ent[dst]
    # 3) Per-edge contraction scores for two consecutive pooling iterations,
    #    reusing the SAME compiled kernel (scales are runtime SMEM scalars).
    scores0 = edge_scores(comb_sigmoids, h_src, h_dst, 0,
                          merge_p, split_q, mult_fac, allow_disag=False)
    scores1 = edge_scores(comb_sigmoids, h_src, h_dst, 1,
                          merge_p, split_q, mult_fac, allow_disag=False)
    jax.block_until_ready((node_ent, scores0, scores1))

    # Correctness check against a pure-JAX mirror of the PyTorch math.
    src_sig = node_sigmoids[src]
    dst_sig = node_sigmoids[dst]
    ref0 = reference_scores(src_sig, dst_sig, comb_sigmoids, 0,
                            merge_p, split_q, mult_fac)
    ref1 = reference_scores(src_sig, dst_sig, comb_sigmoids, 1,
                            merge_p, split_q, mult_fac)
    ref_e = _ref_entropy(jax.nn.softmax(node_sigmoids, axis=-1))

    assert jnp.allclose(scores0, ref0, atol=1e-5, rtol=1e-5), "score mismatch (pool_it=0)"
    assert jnp.allclose(scores1, ref1, atol=1e-5, rtol=1e-5), "score mismatch (pool_it=1)"
    assert jnp.allclose(node_ent, ref_e, atol=1e-5, rtol=1e-5), "evotes mismatch"

    # TODO(synk): the argsort-based greedy edge-contraction loop, cluster
    # relabeling, DGL graph construction (RemoveSelfLoop / ToSimple /
    # dgl.graph / node_subgraph) and the python-dict score_map cache are
    # sequential, data-dependent host logic with no clean Pallas equivalent.

    print("KERNEL_OK")
</pallas_src>

<mosaic_0001>
module attributes {stable_mosaic.version = 11 : i64} {
  func.func @node_entropy_kernel(%arg0: i32, %arg1: memref<8x128xf32, #tpu.memory_space<vmem>>, %arg2: memref<8x128xf32, #tpu.memory_space<vmem>>) attributes {dimension_semantics = [#tpu.dimension_semantics<parallel>], iteration_bounds = array<i64: 1>, scalar_prefetch = 0 : i64, scratch_operands = 0 : i64, tpu.core_type = #tpu.core_type<tc>, window_params = [{transform_indices = @transform_0, window_bounds = array<i64: 8, 128>}, {transform_indices = @transform_1, window_bounds = array<i64: 8, 128>}]} {
    %c0 = arith.constant 0 : index
    %c0_0 = arith.constant 0 : index
    %0 = vector.load %arg1[%c0, %c0_0] : memref<8x128xf32, #tpu.memory_space<vmem>>, vector<8x128xf32>
    %1 = math.absf %0 : vector<8x128xf32>
    %cst = arith.constant 0.000000e+00 : f32
    %2 = vector.broadcast %cst : f32 to vector<8x128xf32>
    %3 = arith.subf %2, %1 : vector<8x128xf32>
    %4 = math.exp %3 : vector<8x128xf32>
    %cst_1 = arith.constant 1.000000e+00 : f32
    %5 = vector.broadcast %cst_1 : f32 to vector<8x128xf32>
    %6 = arith.addf %5, %4 : vector<8x128xf32>
    %cst_2 = arith.constant 1.000000e+00 : f32
    %7 = vector.broadcast %cst_2 : f32 to vector<8x128xf32>
    %8 = arith.divf %7, %6 : vector<8x128xf32>
    %cst_3 = arith.constant 0.000000e+00 : f32
    %9 = vector.broadcast %cst_3 : f32 to vector<8x128xf32>
    %10 = arith.cmpf oge, %0, %9 : vector<8x128xf32>
    %11 = arith.mulf %4, %8 : vector<8x128xf32>
    %12 = arith.select %10, %8, %11 : vector<8x128xi1>, vector<8x128xf32>
    %cst_4 = arith.constant 0.000000e+00 : f32
    %13 = vector.broadcast %cst_4 : f32 to vector<8x128xf32>
    %14 = arith.maximumf %0, %13 : vector<8x128xf32>
    %cst_5 = arith.constant 1.000000e+00 : f32
    %15 = vector.broadcast %cst_5 : f32 to vector<8x128xf32>
    %16 = arith.addf %15, %4 : vector<8x128xf32>
    %17 = math.log %16 : vector<8x128xf32>
    %18 = arith.addf %14, %17 : vector<8x128xf32>
    %19 = arith.mulf %0, %12 : vector<8x128xf32>
    %20 = arith.subf %18, %19 : vector<8x128xf32>
    %c0_6 = arith.constant 0 : index
    %c0_7 = arith.constant 0 : index
    %21 = vector.load %arg2[%c0_6, %c0_7] : memref<8x128xf32, #tpu.memory_space<vmem>>, vector<8x128xf32>
    tpu.vector_store %arg2[%c0_6, %c0_7], %20 {strides = array<i32>} : memref<8x128xf32, #tpu.memory_space<vmem>>, vector<8x128xf32>,
    return
  }
  func.func @transform_0(%arg0: i32) -> (i32, i32) {
    %c0_i32 = arith.constant 0 : i32
    %c0_i32_0 = arith.constant 0 : i32
    return %arg0, %c0_i32 : i32, i32
  }
  func.func @transform_1(%arg0: i32) -> (i32, i32) {
    %c0_i32 = arith.constant 0 : i32
    %c0_i32_0 = arith.constant 0 : i32
    return %arg0, %c0_i32 : i32, i32
  }
}

</mosaic_0001>

<llo_original>
// kernel: node_entropy.1
$region0: #{node_entropy.1}
  #allocation0 [shape = 'u32[]', space=smem, size = 0x4, offset = 0x4, fixed_abs, tag = 'smem constant byte address 0x4 - core index']
  #allocation1 [shape = 'u32[144,128]{1,0:T(1,128)}', space=vmem, size = 0x12000, scoped, tag = 'internal scratch']
  %s0 = inlined_call_operand.vmem [shape: f32[8,128], index: 0, kind: input, shape index: {}]
  %s1 = inlined_call_operand.vmem [shape: f32[8,128], index: 1, kind: output, shape index: {}]
  %s2 = sld [smem:[#allocation0]]
  $region14: #{node_entropy.1} parent=0
    _
  %s4 = ssub.s32 1, %s2
  %s5 = scalar_select 0, %s4, %s2
  // Predicated region
  $region2: #{node_entropy.1} parent=0 // pred_check
    _
  $region3: #{node_entropy.1} parent=0 // pred_check_branch
    %7 = sbr.rel (0) target = $region5
  $region4: #{node_entropy.1} parent=0 // pred_region
    _
  $region5: #{node_entropy.1} parent=0 // pred_fallthru
    _
  %v8 = vld [vmem:[%s0] sm:$0xff]
  %v9 = vand.u32 2147483647, %v8
  %v10 = vsub.f32 0.0, %v9
  %v11 = vmul.f32 %v10, 1.442695
  %v12 = vpow.pop %v11
  %v13 = vadd.f32 %v12, 1.0
  %v14 = vrcp.pop %v13
  %v15 = vmul.f32 1.0, %v14
  %vm16 = vcmp.ge.f32.partialorder %v8, 0.0
  %v17 = vmul.f32 %v12, %v15
  %v18 = vsel %vm16, %v15, %v17
  %v19 = vmax.f32 %v8, 0.0
  %v20 = vlog2.pop %v13
  %v21 = vmul.f32 %v20, 0.6931472
  %v22 = vadd.f32 %v19, %v21
  %v23 = vmul.f32 %v8, %v18
  %v24 = vsub.f32 %v22, %v23
  %25 = vst [vmem:[%s1] sm:$0xff] %v24
  // Predicated region
  $region6: #{node_entropy.1} parent=0 // pred_check
    _
  $region7: #{node_entropy.1} parent=0 // pred_check_branch
    %27 = sbr.rel (0) target = $region9
  $region8: #{node_entropy.1} parent=0 // pred_region
    _
  $region9: #{node_entropy.1} parent=0 // pred_fallthru
    _
  // Predicated region
  $region10: #{node_entropy.1} parent=0 // pred_check
    _
  $region11: #{node_entropy.1} parent=0 // pred_check_branch
    %29 = sbr.rel (0) target = $region13
  $region12: #{node_entropy.1} parent=0 // pred_region
    _
  $region13: #{node_entropy.1} parent=0 // pred_fallthru
    _

</llo_original>
